<compile_context>
chip_gen: v5e
topology: v5e:2x2
jax: 0.10.0
libtpu: 0.0.40
codegen_flags: <defaults>
</compile_context>

<pallas_src>
import math
import functools

import jax
import jax.numpy as jnp
from jax.experimental import pallas as pl
from jax.experimental.pallas import tpu as pltpu


def _cdiv(a: int, b: int) -> int:
    return -(-a // b)


def _round_up(a: int, m: int) -> int:
    return ((a + m - 1) // m) * m


def _pe_add_kernel(x_ref, pe_ref, o_ref, *, scale: float):
    # x_ref / o_ref: (tile_r, tile_w) blocks of the (B, R, W) view (batch dim
    # squeezed).  pe_ref: matching (tile_r, tile_w) block of the PE table.
    x = x_ref[...].astype(jnp.float32)
    pe = pe_ref[...].astype(jnp.float32)
    o_ref[...] = (x * scale + pe).astype(o_ref.dtype)


def make_pe_table(seq_len: int, d_model: int, dtype=jnp.float32) -> jax.Array:
    """Sinusoidal PE table, identical to the PyTorch module's buffer."""
    pos = jnp.arange(seq_len, dtype=jnp.float32)[:, None]            # (L, 1)
    even_i = jnp.arange(0, d_model, 2, dtype=jnp.float32)            # (D/2,)
    angles = pos / (10000.0 ** (even_i / d_model))                   # (L, D/2)
    pe = jnp.stack([jnp.sin(angles), jnp.cos(angles)], axis=-1)      # (L, D/2, 2)
    return pe.reshape(seq_len, d_model).astype(dtype)


def positional_encoding(x: jax.Array, pe: jax.Array | None = None, *,
                        target_block_bytes: int = 2 << 20) -> jax.Array:
    """x: (B, L, D) -> x * sqrt(D) + sinusoidal PE (eval-mode dropout)."""
    assert x.ndim == 3, f"expected (B, L, D), got {x.shape}"
    B, L, D = x.shape
    assert D % 2 == 0, "d_model must be even to interleave sin/cos"
    scale = float(math.sqrt(D))

    if pe is None:
        pe = make_pe_table(L, D, x.dtype)
    else:
        pe = pe[:L].astype(x.dtype)

    itemsize = jnp.dtype(x.dtype).itemsize
    sublane = {4: 8, 2: 16, 1: 32}.get(itemsize, 8)

    # ---- lane-dense packed view: W = lcm(D, 128) whenever it stays in-batch.
    q = 128 // math.gcd(D, 128)                 # original rows per lane row
    if q > 1 and L % q == 0:
        W, R = q * D, L // q
    else:
        W, R = D, L                             # q==1, or unpackable fallback
    xv = x.reshape(B, R, W)
    pev = pe.reshape(R, W)

    # ---- lane tiling guard for pathologically large W.
    if W % 128 == 0:
        max_w = max(128, (target_block_bytes // (itemsize * sublane)) // 128 * 128)
        tile_w = min(W, max_w)
    else:
        tile_w = W                              # must stay full extent (masked)

    # ---- byte-budgeted row tiling (~2 MiB per x block).
    max_rows = max(sublane,
                   (target_block_bytes // (tile_w * itemsize)) // sublane * sublane)
    tile_r = min(max_rows, _round_up(R, sublane))

    # ---- v7x megacore: prefer >= 4 balanced grid steps when there is work.
    nw = _cdiv(W, tile_w)
    if _cdiv(R, tile_r) * nw * B < 4 and R > sublane:
        want_nr = min(_cdiv(R, sublane), _cdiv(4, nw * B))
        tile_r = max(sublane, _round_up(_cdiv(R, want_nr), sublane))
    if tile_r > R:
        tile_r = R                              # single full-extent row block
    nr = _cdiv(R, tile_r)

    kernel = functools.partial(_pe_add_kernel, scale=scale)
    out = pl.pallas_call(
        kernel,
        out_shape=jax.ShapeDtypeStruct((B, R, W), x.dtype),
        grid_spec=pltpu.PrefetchScalarGridSpec(
            num_scalar_prefetch=0,
            # Batch innermost: PE block index is constant along it, so the PE
            # tile is DMA'd once per (row, lane) tile and revisited.
            grid=(nr, nw, B),
            in_specs=[
                pl.BlockSpec((None, tile_r, tile_w), lambda i, w, b: (b, i, w)),
                pl.BlockSpec((tile_r, tile_w), lambda i, w, b: (i, w)),
            ],
            out_specs=pl.BlockSpec((None, tile_r, tile_w),
                                   lambda i, w, b: (b, i, w)),
        ),
        compiler_params=pltpu.CompilerParams(
            dimension_semantics=("parallel", "parallel", "parallel"),
            vmem_limit_bytes=32 * 1024 * 1024,
        ),
    )(xv, pev)
    return out.reshape(B, L, D)


def positional_encoding_ref(x: jax.Array) -> jax.Array:
    """Pure-JAX reference mirroring the PyTorch module (eval mode)."""
    _, L, D = x.shape
    scale = math.sqrt(D)
    pos = jnp.arange(L, dtype=jnp.float32)[:, None]
    even_i = jnp.arange(0, D, 2, dtype=jnp.float32)
    angles = pos / (10000.0 ** (even_i / D))
    pe = jnp.zeros((L, D), jnp.float32)
    pe = pe.at[:, 0::2].set(jnp.sin(angles))
    pe = pe.at[:, 1::2].set(jnp.cos(angles))
    return x * jnp.asarray(scale, x.dtype) + pe[None].astype(x.dtype)


if __name__ == "__main__":
    key = jax.random.PRNGKey(0)
    cases = [
        (2, 16, 32),    # small D: packed lane-dense path (q=4, W=128)
        (2, 37, 128),   # natively lane-dense D, ragged row count
        (2, 9, 96),     # unpackable (q=4, L%q!=0): W=D fallback path
    ]
    for idx, (B, L, D) in enumerate(cases):
        k = jax.random.fold_in(key, idx)
        x = jax.random.normal(k, (B, L, D), dtype=jnp.float32)
        out = jax.block_until_ready(positional_encoding(x))
        ref = positional_encoding_ref(x)
        assert out.shape == x.shape and out.dtype == x.dtype
        err = float(jnp.max(jnp.abs(out - ref)))
        assert jnp.allclose(out, ref, atol=1e-4, rtol=1e-4), (
            f"case {(B, L, D)}: max abs err = {err}")
    print("KERNEL_OK")
</pallas_src>

<mosaic_0001>
module attributes {stable_mosaic.version = 11 : i64} {
  func.func @_pe_add_kernel(%arg0: i32, %arg1: i32, %arg2: i32, %arg3: memref<1x4x128xf32, #tpu.memory_space<vmem>>, %arg4: memref<4x128xf32, #tpu.memory_space<vmem>>, %arg5: memref<1x4x128xf32, #tpu.memory_space<vmem>>) attributes {dimension_semantics = [#tpu.dimension_semantics<parallel>, #tpu.dimension_semantics<parallel>, #tpu.dimension_semantics<parallel>], iteration_bounds = array<i64: 1, 1, 2>, scalar_prefetch = 0 : i64, scratch_operands = 0 : i64, tpu.core_type = #tpu.core_type<tc>, window_params = [{transform_indices = @transform_0, window_bounds = array<i64: 1, 4, 128>}, {transform_indices = @transform_1, window_bounds = array<i64: 4, 128>}, {transform_indices = @transform_2, window_bounds = array<i64: 1, 4, 128>}]} {
    %c0 = arith.constant 0 : index
    %c0_0 = arith.constant 0 : index
    %c0_1 = arith.constant 0 : index
    %0 = vector.load %arg3[%c0, %c0_0, %c0_1] : memref<1x4x128xf32, #tpu.memory_space<vmem>>, vector<1x4x128xf32>
    %1 = vector.shape_cast %0 : vector<1x4x128xf32> to vector<4x128xf32>
    %c0_2 = arith.constant 0 : index
    %c0_3 = arith.constant 0 : index
    %2 = vector.load %arg4[%c0_2, %c0_3] : memref<4x128xf32, #tpu.memory_space<vmem>>, vector<4x128xf32>
    %cst = arith.constant 5.65685415 : f32
    %3 = vector.broadcast %cst : f32 to vector<4x128xf32>
    %4 = arith.mulf %1, %3 : vector<4x128xf32>
    %5 = arith.addf %4, %2 : vector<4x128xf32>
    %c0_4 = arith.constant 0 : index
    %c0_5 = arith.constant 0 : index
    %c0_6 = arith.constant 0 : index
    %6 = vector.load %arg5[%c0_4, %c0_5, %c0_6] : memref<1x4x128xf32, #tpu.memory_space<vmem>>, vector<1x4x128xf32>
    %7 = vector.shape_cast %6 : vector<1x4x128xf32> to vector<4x128xf32>
    %8 = vector.shape_cast %5 : vector<4x128xf32> to vector<1x4x128xf32>
    tpu.vector_store %arg5[%c0_4, %c0_5, %c0_6], %8 {strides = array<i32>} : memref<1x4x128xf32, #tpu.memory_space<vmem>>, vector<1x4x128xf32>,
    return
  }
  func.func @transform_0(%arg0: i32, %arg1: i32, %arg2: i32) -> (i32, i32, i32) {
    %c0_i32 = arith.constant 0 : i32
    return %arg2, %arg0, %arg1 : i32, i32, i32
  }
  func.func @transform_1(%arg0: i32, %arg1: i32, %arg2: i32) -> (i32, i32) {
    %c0_i32 = arith.constant 0 : i32
    return %arg0, %arg1 : i32, i32
  }
  func.func @transform_2(%arg0: i32, %arg1: i32, %arg2: i32) -> (i32, i32, i32) {
    %c0_i32 = arith.constant 0 : i32
    return %arg2, %arg0, %arg1 : i32, i32, i32
  }
}

</mosaic_0001>

<llo_original>
// kernel: tpu_custom_call.1
$region0: #{tpu_custom_call.1}
  #allocation0 [shape = 'u32[]', space=smem, size = 0x4, offset = 0x4, fixed_abs, tag = 'smem constant byte address 0x4 - core index']
  #allocation1 [shape = 'u32[72,128]{1,0:T(1,128)}', space=vmem, size = 0x9000, scoped, tag = 'internal scratch']
  %s0 = inlined_call_operand.hbm [shape: f32[2,4,128], index: 0, kind: input, shape index: {}]
  %s1 = inlined_call_operand.hbm [shape: f32[4,128], index: 1, kind: input, shape index: {}]
  %s2 = inlined_call_operand.hbm [shape: f32[2,4,128], index: 2, kind: output, shape index: {}]
  %s3 = sld [smem:[#allocation0]]
  $region49: #{tpu_custom_call.1} parent=0
    _
  %s5 = ssub.s32 1, %s3
  %s6 = scalar_select 0, %s5, %s3
  $region1: #{tpu_custom_call.1} parent=0
    #allocation2 [shape = 'u8[4096]{0}', space=vmem, size = 0x1000, scoped, tag = 'input window, operand 0']
    #allocation3 [shape = 's32[2]{0}', space=sflag, size = 0x8, scoped, tag = 'scoped memory for tpu_custom_call.1']
    #allocation4 [shape = 's32[2]{0}', space=sflag, size = 0x8, scoped, tag = 'scoped memory for tpu_custom_call.1']
    #allocation5 [shape = 'u8[2048]{0}', space=vmem, size = 0x800, scoped, tag = 'input window, operand 1, single buffered']
    #allocation6 [shape = 's32[1]{0}', space=sflag, size = 0x4, scoped, tag = 'scoped memory for tpu_custom_call.1']
    #allocation7 [shape = 'u8[4096]{0}', space=vmem, size = 0x1000, scoped, tag = 'output window, operand 0']
    %7 = vsyncpa [#allocation3], 0
    %s8 = scalar_lea.sflag [#allocation3], 1
    %9 = vsyncpa %s8, 0
    %10 = vsyncpa [#allocation6], 0
    %11 = vsyncpa [#allocation4], 0
    %s12 = scalar_lea.sflag [#allocation4], 1
    %13 = vsyncpa %s12, 0
    loop: start=0, step=1, limit=4
    $region2: #{tpu_custom_call.1} parent=1 // loop_pre_header
      _
    $region3: #{tpu_custom_call.1} parent=1 // loop_header
      %s15 = sphi 0, %s19
      %p16 = scmp.ge.s32.totalorder %s15, 4
      %s22 = sphi 0, %s41
      %s23 = sphi 0, %s37
      %s24 = sphi 0, %s33
      %s25 = sphi 0, %s22
      %s26 = sphi 0, %s23
      %s27 = sphi 0, %s24
      %s28 = sphi 0, %s25
      %s29 = sphi 0, %s26
      %s30 = sphi 0, %s27
      %s48 = sphi 0, %s50
      %s51 = sphi 0, %s48
      %s52 = sphi 0, %s51
      %s68 = sphi 0, %s52
      %s76 = sphi 0, %s78
      %s79 = sphi 0, %s76
      %s80 = sphi 0, %s79
      %s96 = sphi 0, %s80
      %s106 = sphi 0, %s108
      %s109 = sphi 0, %s106
      %s110 = sphi 0, %s109
      %s126 = sphi 0, %s110
    $region4: #{tpu_custom_call.1} parent=1 // loop_header_branch
      %18 = sbr.rel (%p16) target = $region8
    $region5: #{tpu_custom_call.1} parent=1 // loop_body
      %s20 = ssub.s32 %s15, 1
      %s21 = ssub.s32 %s15, 2
      %s31 = sadd.s32 1, %s24
      %p32 = scmp.ge.s32.totalorder %s31, 2
      %s33 = scalar_select %p32, 0, %s31
      %s34 = sadd.s32 1, %s23
      %s35 = scalar_select %p32, %s34, %s23
      %p36 = scmp.ge.s32.totalorder %s35, 1
      %s37 = scalar_select %p36, 0, %s35
      %s38 = sadd.s32 1, %s22
      %s39 = scalar_select %p36, %s38, %s22
      %p40 = scmp.ge.s32.totalorder %s39, 1
      %s41 = scalar_select %p40, 0, %s39
      %s42 = ssub.s32 %s24, %s33
      %s43 = ssub.s32 %s22, %s41
      %s44 = sor.u32 %s42, %s43
      %s45 = ssub.s32 %s23, %s37
      %s46 = sor.u32 %s44, %s45
      %p47 = scmp.eq.s32.totalorder %s46, 0
      %s49 = sadd.s32 %s48, 1
      %s50 = scalar_select %p47, %s48, %s49
      %p53 = pneg %p47
      %p54 = scmp.eq.s32.totalorder %s15, 1
      %p55 = por %p53, %p54
      %p56 = scmp.ne.s32.totalorder %s48, %s51
      %p57 = scmp.eq.s32.totalorder %s15, 0
      %p58 = por %p56, %p57
      %p59 = scmp.ne.s32.totalorder %s48, %s51
      %p60 = scmp.eq.s32.totalorder %s20, 1
      %p61 = por %p59, %p60
      %p62 = scmp.ne.s32.totalorder %s51, %s52
      %p63 = scmp.eq.s32.totalorder %s20, 0
      %p64 = por %p62, %p63
      %p65 = scmp.ne.s32.totalorder %s51, %s52
      %p66 = scmp.eq.s32.totalorder %s21, 1
      %p67 = por %p65, %p66
      %p69 = scmp.ne.s32.totalorder %s52, %s68
      %p70 = scmp.eq.s32.totalorder %s21, 0
      %p71 = por %p69, %p70
      %s72 = ssub.s32 %s22, %s41
      %s73 = ssub.s32 %s23, %s37
      %s74 = sor.u32 %s72, %s73
      %p75 = scmp.eq.s32.totalorder %s74, 0
      %s77 = sadd.s32 %s76, 1
      %s78 = scalar_select %p75, %s76, %s77
      %p81 = pneg %p75
      %p82 = scmp.eq.s32.totalorder %s15, 1
      %p83 = por %p81, %p82
      %p84 = scmp.ne.s32.totalorder %s76, %s79
      %p85 = scmp.eq.s32.totalorder %s15, 0
      %p86 = por %p84, %p85
      %p87 = scmp.ne.s32.totalorder %s76, %s79
      %p88 = scmp.eq.s32.totalorder %s20, 1
      %p89 = por %p87, %p88
      %p90 = scmp.ne.s32.totalorder %s79, %s80
      %p91 = scmp.eq.s32.totalorder %s20, 0
      %p92 = por %p90, %p91
      %p93 = scmp.ne.s32.totalorder %s79, %s80
      %p94 = scmp.eq.s32.totalorder %s21, 1
      %p95 = por %p93, %p94
      %p97 = scmp.ne.s32.totalorder %s80, %s96
      %p98 = scmp.eq.s32.totalorder %s21, 0
      %p99 = por %p97, %p98
      %s100 = ssub.s32 %s24, %s33
      %s101 = ssub.s32 %s22, %s41
      %s102 = sor.u32 %s100, %s101
      %s103 = ssub.s32 %s23, %s37
      %s104 = sor.u32 %s102, %s103
      %p105 = scmp.eq.s32.totalorder %s104, 0
      %s107 = sadd.s32 %s106, 1
      %s108 = scalar_select %p105, %s106, %s107
      %p111 = pneg %p105
      %p112 = scmp.eq.s32.totalorder %s15, 1
      %p113 = por %p111, %p112
      %p114 = scmp.ne.s32.totalorder %s106, %s109
      %p115 = scmp.eq.s32.totalorder %s15, 0
      %p116 = por %p114, %p115
      %p117 = scmp.ne.s32.totalorder %s106, %s109
      %p118 = scmp.eq.s32.totalorder %s20, 1
      %p119 = por %p117, %p118
      %p120 = scmp.ne.s32.totalorder %s109, %s110
      %p121 = scmp.eq.s32.totalorder %s20, 0
      %p122 = por %p120, %p121
      %p123 = scmp.ne.s32.totalorder %s109, %s110
      %p124 = scmp.eq.s32.totalorder %s21, 1
      %p125 = por %p123, %p124
      %p127 = scmp.ne.s32.totalorder %s110, %s126
      %p128 = scmp.eq.s32.totalorder %s21, 0
      %p129 = por %p127, %p128
      %p130 = scmp.le.s32.totalorder 1, %s15
      %p131 = scmp.lt.s32.totalorder %s15, 3
      %p132 = pnand %p130, %p131
      %p133 = pneg %p132
      // Predicated region
      $region9: #{tpu_custom_call.1} parent=5 // pred_check
        _
      $region10: #{tpu_custom_call.1} parent=5 // pred_check_branch
        %135 = sbr.rel (%p132) target = $region12
      $region11: #{tpu_custom_call.1} parent=5 // pred_region
        %s136 = ssub.s32 %s15, 1
        // Predicated region
        $region13: #{tpu_custom_call.1} parent=11 // pred_check
          %p137 = pneg %p92
        $region14: #{tpu_custom_call.1} parent=11 // pred_check_branch
          %139 = sbr.rel (%p137) target = $region16
        $region15: #{tpu_custom_call.1} parent=11 // pred_region
          %141 = vsyncadd [#allocation6], 0
          %s142 = sadd.s32 %s26, %s25
          %s143 = smul.addr %s142, 4
          %s144 = scalar_lea.hbm %s1, %s143
          %s146 = sshll.u32 %s144, 4
          %s147 = int_to_ptr.hbm [resolvable:$true] %s146
          %s148 = sshll.u32 [#allocation5], 4
          %s149 = int_to_ptr.vmem [resolvable:$true] %s148
          %151 = dma.hbm_to_vmem [thread:$0]  %s147, 64, %s149, [#allocation6]
        $region16: #{tpu_custom_call.1} parent=11 // pred_fallthru
          _
      $region12: #{tpu_custom_call.1} parent=5 // pred_fallthru
        _
      %p152 = scmp.lt.s32.totalorder %s15, 2
      // Predicated region
      $region17: #{tpu_custom_call.1} parent=5 // pred_check
        %p153 = pneg %p152
      $region18: #{tpu_custom_call.1} parent=5 // pred_check_branch
        %155 = sbr.rel (%p153) target = $region20
      $region19: #{tpu_custom_call.1} parent=5 // pred_region
        // Predicated region
        $region21: #{tpu_custom_call.1} parent=19 // pred_check
          %p156 = pneg %p58
        $region22: #{tpu_custom_call.1} parent=19 // pred_check_branch
          %158 = sbr.rel (%p156) target = $region24
        $region23: #{tpu_custom_call.1} parent=19 // pred_region
          %s159 = sand.u32 %s48, 1
          %s160 = scalar_lea.sflag [#allocation3], %s159
          %s161 = sand.u32 %s48, 1
          %s162 = smul.addr %s161, 4
          %s163 = scalar_lea.vmem [#allocation2], %s162
          %165 = vsyncadd %s160, 0
          %s166 = sadd.s32 %s23, %s22
          %s167 = sadd.s32 %s166, %s24
          %s168 = smul.addr %s167, 4
          %s169 = scalar_lea.hbm %s0, %s168
          %s171 = sshll.u32 %s169, 4
          %s172 = int_to_ptr.hbm [resolvable:$true] %s171
          %s173 = sshll.u32 %s163, 4
          %s174 = int_to_ptr.vmem [resolvable:$true] %s173
          %176 = dma.hbm_to_vmem [thread:$0]  %s172, 64, %s174, %s160
        $region24: #{tpu_custom_call.1} parent=19 // pred_fallthru
          _
      $region20: #{tpu_custom_call.1} parent=5 // pred_fallthru
        _
      %p177 = scmp.le.s32.totalorder 1, %s15
      %p178 = scmp.lt.s32.totalorder %s15, 3
      %p179 = pnand %p177, %p178
      %p180 = pneg %p179
      // Predicated region
      $region25: #{tpu_custom_call.1} parent=5 // pred_check
        _
      $region26: #{tpu_custom_call.1} parent=5 // pred_check_branch
        %182 = sbr.rel (%p179) target = $region28
      $region27: #{tpu_custom_call.1} parent=5 // pred_region
        %s183 = ssub.s32 %s15, 1
        %s184 = sand.u32 %s51, 1
        %s185 = scalar_lea.sflag [#allocation3], %s184
        %s186 = sand.u32 %s51, 1
        %s187 = smul.addr %s186, 4
        %s188 = scalar_lea.vmem [#allocation2], %s187
        // Predicated region
        $region29: #{tpu_custom_call.1} parent=27 // pred_check
          %p189 = pneg %p64
        $region30: #{tpu_custom_call.1} parent=27 // pred_check_branch
          %191 = sbr.rel (%p189) target = $region32
        $region31: #{tpu_custom_call.1} parent=27 // pred_region
          %193 = dma.done %s185, 64
        $region32: #{tpu_custom_call.1} parent=27 // pred_fallthru
          _
        // Predicated region
        $region33: #{tpu_custom_call.1} parent=27 // pred_check
          %p194 = pneg %p92
        $region34: #{tpu_custom_call.1} parent=27 // pred_check_branch
          %196 = sbr.rel (%p194) target = $region36
        $region35: #{tpu_custom_call.1} parent=27 // pred_region
          %198 = dma.done [#allocation6], 64
        $region36: #{tpu_custom_call.1} parent=27 // pred_fallthru
          _
        %s199 = sand.u32 %s51, 1
        %s200 = scalar_lea.sflag [#allocation3], %s199
        %s201 = sand.u32 %s51, 1
        %s202 = smul.addr %s201, 4
        %s203 = scalar_lea.vmem [#allocation2], %s202
        %p204 = pneg %p64
        %p205 = pneg %p61
        %p206 = pneg %p92
        %p207 = pneg %p89
        %p208 = pneg %p122
        %p209 = pneg %p119
        %s210 = sand.u32 %s109, 1
        %s211 = scalar_lea.sflag [#allocation4], %s210
        %s212 = sand.u32 %s109, 1
        %s213 = smul.addr %s212, 4
        %s214 = scalar_lea.vmem [#allocation7], %s213
        %v215 = vld [vmem:[%s188] sm:$0xf]
        %v216 = vld [vmem:[#allocation5] sm:$0xf]
        %v217 = vmul.f32 %v215, 5.656854
        %v218 = vadd.f32 %v217, %v216
        %219 = vst [vmem:[%s214] sm:$0xf] %v218
        %s220 = sand.u32 %s109, 1
        %s221 = scalar_lea.sflag [#allocation4], %s220
        %s222 = sand.u32 %s109, 1
        %s223 = smul.addr %s222, 4
        %s224 = scalar_lea.vmem [#allocation7], %s223
        // Predicated region
        $region37: #{tpu_custom_call.1} parent=27 // pred_check
          %p225 = pneg %p119
        $region38: #{tpu_custom_call.1} parent=27 // pred_check_branch
          %227 = sbr.rel (%p225) target = $region40
        $region39: #{tpu_custom_call.1} parent=27 // pred_region
          %229 = vsyncadd %s221, 0
          %s230 = sadd.s32 %s26, %s25
          %s231 = sadd.s32 %s230, %s27
          %s232 = smul.addr %s231, 4
          %s233 = scalar_lea.hbm %s2, %s232
          %s235 = sshll.u32 %s224, 4
          %s236 = int_to_ptr.vmem [resolvable:$true] %s235
          %s237 = sshll.u32 %s233, 4
          %s238 = int_to_ptr.hbm [resolvable:$true] %s237
          %240 = dma.vmem_to_hbm [thread:$0]  %s236, 64, %s238, %s221
        $region40: #{tpu_custom_call.1} parent=27 // pred_fallthru
          _
      $region28: #{tpu_custom_call.1} parent=5 // pred_fallthru
        _
      %p241 = scmp.le.s32.totalorder 2, %s15
      // Predicated region
      $region41: #{tpu_custom_call.1} parent=5 // pred_check
        %p242 = pneg %p241
      $region42: #{tpu_custom_call.1} parent=5 // pred_check_branch
        %244 = sbr.rel (%p242) target = $region44
      $region43: #{tpu_custom_call.1} parent=5 // pred_region
        %s245 = ssub.s32 %s15, 2
        // Predicated region
        $region45: #{tpu_custom_call.1} parent=43 // pred_check
          %p246 = pneg %p125
        $region46: #{tpu_custom_call.1} parent=43 // pred_check_branch
          %248 = sbr.rel (%p246) target = $region48
        $region47: #{tpu_custom_call.1} parent=43 // pred_region
          %s249 = sand.u32 %s110, 1
          %s250 = scalar_lea.sflag [#allocation4], %s249
          %s251 = sand.u32 %s110, 1
          %s252 = smul.addr %s251, 4
          %s253 = scalar_lea.vmem [#allocation7], %s252
          %255 = dma.done %s250, 64
        $region48: #{tpu_custom_call.1} parent=43 // pred_fallthru
          _
      $region44: #{tpu_custom_call.1} parent=5 // pred_fallthru
        _
    $region6: #{tpu_custom_call.1} parent=1 // loop_footer
      %s19 = sadd.s32 1, %s15
    $region7: #{tpu_custom_call.1} parent=1 // loop_footer_branch
      %14 = sbr.rel target = $region3
    $region8: #{tpu_custom_call.1} parent=1 // loop_exit
      _
    %256 = vsyncpa [#allocation3], 1
    %s257 = scalar_lea.sflag [#allocation3], 1
    %258 = vsyncpa %s257, 1
    %259 = vsyncpa [#allocation6], 1
    %260 = vsyncpa [#allocation4], 1
    %s261 = scalar_lea.sflag [#allocation4], 1
    %262 = vsyncpa %s261, 1

</llo_original>
